<compile_context>
chip_gen: v5e
topology: v5e:2x2
jax: 0.10.0
libtpu: 0.0.40
codegen_flags: <defaults>
</compile_context>

<pallas_src>
import functools

import jax
import jax.numpy as jnp
from jax.experimental import pallas as pl
from jax.experimental.pallas import tpu as pltpu

EPS = 1e-5
NEG_SLOPE = 0.2
_CT = 128          # output-channel tile (lane-dense)


def _round_up(x, m):
    return (x + m - 1) // m * m


def _disc_block_kernel(x_ref, w_ref, b_ref, o_ref, *, wm, wout, hout, normalize):
    """One (batch, cout-tile) grid step.

    x_ref: (1, Npad, C2)  space-to-depth rows, flattened & zero padded
    w_ref: (4, C2, CT)    weights for the 4 shifted matmuls
    b_ref: (1, CT)  f32   bias (only used when normalize=False)
    o_ref: (1, Pm, CT) f32 with Pm = Hout*(Wout+1); column Wout is garbage.
    """
    pm = o_ref.shape[1]

    # 2x2 / stride-1 conv on the space-to-depth rep == 4 shifted matmuls.
    y = None
    for q, off in enumerate((0, 1, wm, wm + 1)):
        lhs = x_ref[0, pl.ds(off, pm), :]                         # (Pm, C2)
        part = jnp.dot(lhs, w_ref[q], preferred_element_type=jnp.float32)
        y = part if y is None else y + part                       # (Pm, CT) f32

    if normalize:
        # InstanceNorm2d(affine=False): conv bias cancels -> never added.
        # Mask the wrap-around column out of the statistics; one-pass stats.
        col = jax.lax.broadcasted_iota(jnp.int32, (pm, 1), 0) % wm
        mask = (col < wout).astype(jnp.float32)                   # (Pm, 1)
        inv_n = 1.0 / float(hout * wout)
        ym = y * mask
        mean = jnp.sum(ym, axis=0, keepdims=True) * inv_n         # (1, CT)
        ex2 = jnp.sum(ym * y, axis=0, keepdims=True) * inv_n      # E[y^2], masked
        var = jnp.maximum(ex2 - mean * mean, 0.0)
        y = (y - mean) * jax.lax.rsqrt(var + EPS)
    else:
        y = y + b_ref[...]

    # LeakyReLU(0.2)
    y = jnp.maximum(y, NEG_SLOPE * y)
    o_ref[0] = y.astype(o_ref.dtype)


def discriminator_block(x_nchw, weight, bias, *, normalize=True,
                        compute_dtype=jnp.bfloat16):
    """x_nchw: (B, Cin, H, W); weight: (Cout, Cin, 4, 4); bias: (Cout,).

    Returns (B, Cout, H//2, W//2) float32 in NCHW (matching PyTorch).
    """
    B, Cin, H, W = x_nchw.shape
    Cout = weight.shape[0]
    assert weight.shape == (Cout, Cin, 4, 4)
    assert H % 2 == 0 and W % 2 == 0, "space-to-depth path requires even H, W"

    Hout, Wout = H // 2, W // 2          # (H + 2 - 4)//2 + 1
    Hm, Wm = Hout + 1, Wout + 1          # macro grid, = (H+2)/2
    Pm = Hout * Wm                       # rows produced per image by the kernel
    C2 = 4 * Cin                         # s2d depth == matmul K dim
    Cout_pad = _round_up(Cout, _CT)
    n_ct = Cout_pad // _CT
    Npad = _round_up(Hm * Wm + 1, 8)     # +1: last shifted window runs one row over

    # ---- glue (pure layout, no data inflation): NCHW -> padded NHWC -> s2d --
    x_nhwc = jnp.transpose(x_nchw, (0, 2, 3, 1))
    x_pad = jnp.pad(x_nhwc, ((0, 0), (1, 1), (1, 1), (0, 0)))    # (B, 2Hm, 2Wm, Cin)
    s2d = x_pad.reshape(B, Hm, 2, Wm, 2, Cin)
    s2d = jnp.transpose(s2d, (0, 1, 3, 2, 4, 5)).reshape(B, Hm * Wm, C2)
    s2d = jnp.pad(s2d, ((0, 0), (0, Npad - Hm * Wm), (0, 0)))
    s2d = s2d.astype(compute_dtype)

    # weight (Cout, Cin, kh, kw) -> (4 [dh*2+dw], C2 [(sh*2+sw)*Cin+ci], Cout_pad)
    w2 = weight.reshape(Cout, Cin, 2, 2, 2, 2)        # (co, ci, dh, sh, dw, sw)
    w2 = jnp.transpose(w2, (2, 4, 3, 5, 1, 0)).reshape(4, C2, Cout)
    w2 = jnp.pad(w2, ((0, 0), (0, 0), (0, Cout_pad - Cout))).astype(compute_dtype)
    b2 = jnp.pad(bias.astype(jnp.float32).reshape(1, Cout),
                 ((0, 0), (0, Cout_pad - Cout)))

    kernel = functools.partial(_disc_block_kernel, wm=Wm, wout=Wout, hout=Hout,
                               normalize=normalize)

    # VMEM budget: double-buffered blocks + headroom (v5e default is only 16 MiB).
    esize = jnp.dtype(compute_dtype).itemsize
    block_bytes = (Npad * C2 * esize) + (4 * C2 * _CT * esize) \
        + (_CT * 4) + (Pm * _CT * 4)
    vmem_limit = int(min(max(32 << 20, 2 * block_bytes + (8 << 20)), 64 << 20))

    out = pl.pallas_call(
        kernel,
        out_shape=jax.ShapeDtypeStruct((B, Pm, Cout_pad), jnp.float32),
        grid_spec=pltpu.PrefetchScalarGridSpec(
            num_scalar_prefetch=0,
            grid=(B, n_ct),
            in_specs=[
                pl.BlockSpec((1, Npad, C2), lambda b, ct: (b, 0, 0)),
                pl.BlockSpec((4, C2, _CT), lambda b, ct: (0, 0, ct)),
                pl.BlockSpec((1, _CT), lambda b, ct: (0, ct)),
            ],
            out_specs=pl.BlockSpec((1, Pm, _CT), lambda b, ct: (b, 0, ct)),
        ),
        compiler_params=pltpu.CompilerParams(
            dimension_semantics=("parallel", "parallel"),
            vmem_limit_bytes=vmem_limit),
    )(s2d, w2, b2)

    # TODO(synk): for very large layers (e.g. 256x256 inputs with Cin>=128) the
    # spatial axis should be P-tiled with a two-pass instance norm instead of
    # relying on a raised vmem_limit_bytes.

    # Drop the garbage column + channel padding; back to NCHW (a stacked
    # discriminator should instead consume the channels-last layout directly).
    out = out.reshape(B, Hout, Wm, Cout_pad)[:, :, :Wout, :Cout]
    return jnp.transpose(out, (0, 3, 1, 2))


def _reference(x_nchw, weight, bias, *, normalize=True):
    y = jax.lax.conv_general_dilated(
        x_nchw, weight, window_strides=(2, 2), padding=((1, 1), (1, 1)),
        dimension_numbers=("NCHW", "OIHW", "NCHW"))
    y = y + bias[None, :, None, None]
    if normalize:
        mean = jnp.mean(y, axis=(2, 3), keepdims=True)
        var = jnp.mean((y - mean) ** 2, axis=(2, 3), keepdims=True)
        y = (y - mean) * jax.lax.rsqrt(var + EPS)
    return jnp.where(y >= 0, y, NEG_SLOPE * y)


if __name__ == "__main__":
    key = jax.random.PRNGKey(0)
    B, Cin, H, W = 2, 4, 16, 16
    Cout = 8

    kx, kw, kb = jax.random.split(key, 3)
    x = jax.random.normal(kx, (B, Cin, H, W), dtype=jnp.float32)
    weight = 0.1 * jax.random.normal(kw, (Cout, Cin, 4, 4), dtype=jnp.float32)
    bias = 0.05 * jax.random.normal(kb, (Cout,), dtype=jnp.float32)

    ref = _reference(x, weight, bias)

    # Exact-semantics check (f32 compute path).
    out_f32 = jax.block_until_ready(
        discriminator_block(x, weight, bias, compute_dtype=jnp.float32))
    assert out_f32.shape == (B, Cout, H // 2, W // 2)
    assert jnp.allclose(out_f32, ref, atol=1e-4, rtol=1e-4), \
        float(jnp.max(jnp.abs(out_f32 - ref)))

    # Fast path: bf16 MXU operands, f32 accumulation (looser tolerance).
    out_bf16 = jax.block_until_ready(discriminator_block(x, weight, bias))
    assert jnp.allclose(out_bf16, ref, atol=1e-1, rtol=1e-1), \
        float(jnp.max(jnp.abs(out_bf16 - ref)))

    # normalize=False (CycleGAN's first discriminator block): conv+bias+LeakyReLU.
    out_nn = jax.block_until_ready(
        discriminator_block(x, weight, bias, normalize=False,
                            compute_dtype=jnp.float32))
    ref_nn = _reference(x, weight, bias, normalize=False)
    assert jnp.allclose(out_nn, ref_nn, atol=1e-4, rtol=1e-4), \
        float(jnp.max(jnp.abs(out_nn - ref_nn)))

    print("KERNEL_OK")
</pallas_src>

<mosaic_0001>
module attributes {stable_mosaic.version = 11 : i64} {
  func.func @_disc_block_kernel(%arg0: i32, %arg1: i32, %arg2: memref<1x88x16xf32, #tpu.memory_space<vmem>>, %arg3: memref<4x16x128xf32, #tpu.memory_space<vmem>>, %arg4: memref<1x128xf32, #tpu.memory_space<vmem>>, %arg5: memref<1x72x128xf32, #tpu.memory_space<vmem>>) attributes {dimension_semantics = [#tpu.dimension_semantics<parallel>, #tpu.dimension_semantics<parallel>], iteration_bounds = array<i64: 2, 1>, scalar_prefetch = 0 : i64, scratch_operands = 0 : i64, tpu.core_type = #tpu.core_type<tc>, window_params = [{transform_indices = @transform_0, window_bounds = array<i64: 1, 88, 16>}, {transform_indices = @transform_1, window_bounds = array<i64: 4, 16, 128>}, {transform_indices = @transform_2, window_bounds = array<i64: 1, 128>}, {transform_indices = @transform_3, window_bounds = array<i64: 1, 72, 128>}]} {
    %c0 = arith.constant 0 : index
    %c0_0 = arith.constant 0 : index
    %c0_1 = arith.constant 0 : index
    %0 = vector.load %arg2[%c0, %c0_0, %c0_1] : memref<1x88x16xf32, #tpu.memory_space<vmem>>, vector<1x72x16xf32>
    %1 = vector.shape_cast %0 : vector<1x72x16xf32> to vector<72x16xf32>
    %c0_2 = arith.constant 0 : index
    %c0_3 = arith.constant 0 : index
    %c0_4 = arith.constant 0 : index
    %2 = vector.load %arg3[%c0_2, %c0_3, %c0_4] : memref<4x16x128xf32, #tpu.memory_space<vmem>>, vector<1x16x128xf32>
    %3 = vector.shape_cast %2 : vector<1x16x128xf32> to vector<16x128xf32>
    %cst = arith.constant dense<0.000000e+00> : vector<72x128xf32>
    %4 = tpu.matmul %1, %3, %cst {dimension_numbers = #tpu.dot_dimension_numbers<[1], [0], [0], [1], [0, 0, 1, 1], [], []>} : vector<72x16xf32>, vector<16x128xf32>, vector<72x128xf32> -> vector<72x128xf32>
    %c0_5 = arith.constant 0 : index
    %c1 = arith.constant 1 : index
    %c0_6 = arith.constant 0 : index
    %5 = vector.load %arg2[%c0_5, %c1, %c0_6] : memref<1x88x16xf32, #tpu.memory_space<vmem>>, vector<1x72x16xf32>
    %6 = vector.shape_cast %5 : vector<1x72x16xf32> to vector<72x16xf32>
    %c1_7 = arith.constant 1 : index
    %c0_8 = arith.constant 0 : index
    %c0_9 = arith.constant 0 : index
    %7 = vector.load %arg3[%c1_7, %c0_8, %c0_9] : memref<4x16x128xf32, #tpu.memory_space<vmem>>, vector<1x16x128xf32>
    %8 = vector.shape_cast %7 : vector<1x16x128xf32> to vector<16x128xf32>
    %cst_10 = arith.constant dense<0.000000e+00> : vector<72x128xf32>
    %9 = tpu.matmul %6, %8, %cst_10 {dimension_numbers = #tpu.dot_dimension_numbers<[1], [0], [0], [1], [0, 0, 1, 1], [], []>} : vector<72x16xf32>, vector<16x128xf32>, vector<72x128xf32> -> vector<72x128xf32>
    %10 = arith.addf %4, %9 : vector<72x128xf32>
    %c0_11 = arith.constant 0 : index
    %c9 = arith.constant 9 : index
    %c0_12 = arith.constant 0 : index
    %11 = vector.load %arg2[%c0_11, %c9, %c0_12] : memref<1x88x16xf32, #tpu.memory_space<vmem>>, vector<1x72x16xf32>
    %12 = vector.shape_cast %11 : vector<1x72x16xf32> to vector<72x16xf32>
    %c2 = arith.constant 2 : index
    %c0_13 = arith.constant 0 : index
    %c0_14 = arith.constant 0 : index
    %13 = vector.load %arg3[%c2, %c0_13, %c0_14] : memref<4x16x128xf32, #tpu.memory_space<vmem>>, vector<1x16x128xf32>
    %14 = vector.shape_cast %13 : vector<1x16x128xf32> to vector<16x128xf32>
    %cst_15 = arith.constant dense<0.000000e+00> : vector<72x128xf32>
    %15 = tpu.matmul %12, %14, %cst_15 {dimension_numbers = #tpu.dot_dimension_numbers<[1], [0], [0], [1], [0, 0, 1, 1], [], []>} : vector<72x16xf32>, vector<16x128xf32>, vector<72x128xf32> -> vector<72x128xf32>
    %16 = arith.addf %10, %15 : vector<72x128xf32>
    %c0_16 = arith.constant 0 : index
    %c10 = arith.constant 10 : index
    %c0_17 = arith.constant 0 : index
    %17 = vector.load %arg2[%c0_16, %c10, %c0_17] : memref<1x88x16xf32, #tpu.memory_space<vmem>>, vector<1x72x16xf32>
    %18 = vector.shape_cast %17 : vector<1x72x16xf32> to vector<72x16xf32>
    %c3 = arith.constant 3 : index
    %c0_18 = arith.constant 0 : index
    %c0_19 = arith.constant 0 : index
    %19 = vector.load %arg3[%c3, %c0_18, %c0_19] : memref<4x16x128xf32, #tpu.memory_space<vmem>>, vector<1x16x128xf32>
    %20 = vector.shape_cast %19 : vector<1x16x128xf32> to vector<16x128xf32>
    %cst_20 = arith.constant dense<0.000000e+00> : vector<72x128xf32>
    %21 = tpu.matmul %18, %20, %cst_20 {dimension_numbers = #tpu.dot_dimension_numbers<[1], [0], [0], [1], [0, 0, 1, 1], [], []>} : vector<72x16xf32>, vector<16x128xf32>, vector<72x128xf32> -> vector<72x128xf32>
    %22 = arith.addf %16, %21 : vector<72x128xf32>
    %23 = tpu.iota {dimensions = array<i32: 0>} : vector<72x1xi32>
    %c9_i32 = arith.constant 9 : i32
    %c0_i32 = arith.constant 0 : i32
    %24 = arith.cmpi eq, %c9_i32, %c0_i32 : i32
    %c1_i32 = arith.constant 1 : i32
    %25 = arith.select %24, %c1_i32, %c9_i32 : i32
    %26 = vector.broadcast %25 : i32 to vector<72x1xi32>
    %27 = arith.remsi %23, %26 : vector<72x1xi32>
    %c0_i32_21 = arith.constant 0 : i32
    %28 = vector.broadcast %c0_i32_21 : i32 to vector<72x1xi32>
    %29 = arith.cmpi ne, %27, %28 : vector<72x1xi32>
    %c0_i32_22 = arith.constant 0 : i32
    %30 = vector.broadcast %c0_i32_22 : i32 to vector<72x1xi32>
    %31 = arith.cmpi slt, %27, %30 : vector<72x1xi32>
    %c0_i32_23 = arith.constant 0 : i32
    %32 = arith.cmpi slt, %25, %c0_i32_23 : i32
    %33 = vector.broadcast %32 : i1 to vector<72x1xi1>
    %34 = vector.broadcast %33 : vector<72x1xi1> to vector<72x1xi1>
    %35 = arith.xori %31, %34 : vector<72x1xi1>
    %36 = arith.andi %35, %29 : vector<72x1xi1>
    %37 = vector.broadcast %25 : i32 to vector<72x1xi32>
    %38 = arith.addi %27, %37 : vector<72x1xi32>
    %39 = arith.select %36, %38, %27 : vector<72x1xi1>, vector<72x1xi32>
    %c8_i32 = arith.constant 8 : i32
    %40 = vector.broadcast %c8_i32 : i32 to vector<72x1xi32>
    %41 = arith.cmpi slt, %39, %40 : vector<72x1xi32>
    %42 = arith.extui %41 : vector<72x1xi1> to vector<72x1xi32>
    %43 = arith.sitofp %42 : vector<72x1xi32> to vector<72x1xf32>
    %44 = vector.broadcast %43 : vector<72x1xf32> to vector<72x128xf32>
    %45 = arith.mulf %22, %44 : vector<72x128xf32>
    %cst_24 = arith.constant dense<0.000000e+00> : vector<128xf32>
    %46 = vector.multi_reduction <add>, %45, %cst_24 [0] : vector<72x128xf32> to vector<128xf32>
    %47 = vector.shape_cast %46 : vector<128xf32> to vector<1x128xf32>
    %cst_25 = arith.constant 1.562500e-02 : f32
    %48 = vector.broadcast %cst_25 : f32 to vector<1x128xf32>
    %49 = arith.mulf %47, %48 : vector<1x128xf32>
    %50 = arith.mulf %45, %22 : vector<72x128xf32>
    %cst_26 = arith.constant dense<0.000000e+00> : vector<128xf32>
    %51 = vector.multi_reduction <add>, %50, %cst_26 [0] : vector<72x128xf32> to vector<128xf32>
    %52 = vector.shape_cast %51 : vector<128xf32> to vector<1x128xf32>
    %cst_27 = arith.constant 1.562500e-02 : f32
    %53 = vector.broadcast %cst_27 : f32 to vector<1x128xf32>
    %54 = arith.mulf %52, %53 : vector<1x128xf32>
    %55 = arith.mulf %49, %49 : vector<1x128xf32>
    %56 = arith.subf %54, %55 : vector<1x128xf32>
    %cst_28 = arith.constant 0.000000e+00 : f32
    %57 = vector.broadcast %cst_28 : f32 to vector<1x128xf32>
    %58 = arith.maximumf %56, %57 : vector<1x128xf32>
    %59 = vector.broadcast %49 : vector<1x128xf32> to vector<72x128xf32>
    %60 = arith.subf %22, %59 : vector<72x128xf32>
    %cst_29 = arith.constant 9.99999974E-6 : f32
    %61 = vector.broadcast %cst_29 : f32 to vector<1x128xf32>
    %62 = arith.addf %58, %61 : vector<1x128xf32>
    %63 = math.rsqrt %62 : vector<1x128xf32>
    %64 = vector.broadcast %63 : vector<1x128xf32> to vector<72x128xf32>
    %65 = arith.mulf %60, %64 : vector<72x128xf32>
    %cst_30 = arith.constant 2.000000e-01 : f32
    %66 = vector.broadcast %cst_30 : f32 to vector<72x128xf32>
    %67 = arith.mulf %66, %65 : vector<72x128xf32>
    %68 = arith.maximumf %65, %67 : vector<72x128xf32>
    %c0_31 = arith.constant 0 : index
    %c0_32 = arith.constant 0 : index
    %c0_33 = arith.constant 0 : index
    %69 = vector.load %arg5[%c0_31, %c0_32, %c0_33] : memref<1x72x128xf32, #tpu.memory_space<vmem>>, vector<1x72x128xf32>
    %70 = vector.shape_cast %69 : vector<1x72x128xf32> to vector<72x128xf32>
    %71 = vector.shape_cast %68 : vector<72x128xf32> to vector<1x72x128xf32>
    tpu.vector_store %arg5[%c0_31, %c0_32, %c0_33], %71 {strides = array<i32>} : memref<1x72x128xf32, #tpu.memory_space<vmem>>, vector<1x72x128xf32>,
    return
  }
  func.func @transform_0(%arg0: i32, %arg1: i32) -> (i32, i32, i32) {
    %c0_i32 = arith.constant 0 : i32
    %c0_i32_0 = arith.constant 0 : i32
    %c0_i32_1 = arith.constant 0 : i32
    return %arg0, %c0_i32, %c0_i32_0 : i32, i32, i32
  }
  func.func @transform_1(%arg0: i32, %arg1: i32) -> (i32, i32, i32) {
    %c0_i32 = arith.constant 0 : i32
    %c0_i32_0 = arith.constant 0 : i32
    %c0_i32_1 = arith.constant 0 : i32
    return %c0_i32, %c0_i32_0, %arg1 : i32, i32, i32
  }
  func.func @transform_2(%arg0: i32, %arg1: i32) -> (i32, i32) {
    %c0_i32 = arith.constant 0 : i32
    %c0_i32_0 = arith.constant 0 : i32
    return %c0_i32, %arg1 : i32, i32
  }
  func.func @transform_3(%arg0: i32, %arg1: i32) -> (i32, i32, i32) {
    %c0_i32 = arith.constant 0 : i32
    %c0_i32_0 = arith.constant 0 : i32
    return %arg0, %c0_i32, %arg1 : i32, i32, i32
  }
}

</mosaic_0001>

<llo_original>
// kernel: tpu_custom_call.1
$region0: #{tpu_custom_call.1}
  #allocation0 [shape = 'u32[]', space=smem, size = 0x4, offset = 0x4, fixed_abs, tag = 'smem constant byte address 0x4 - core index']
  #allocation1 [shape = 'u32[72,128]{1,0:T(1,128)}', space=vmem, size = 0x9000, scoped, tag = 'internal scratch']
  %s0 = inlined_call_operand.vmem [shape: f32[2,88,16], index: 0, kind: input, shape index: {}]
  %s1 = inlined_call_operand.vmem [shape: f32[4,16,128], index: 1, kind: input, shape index: {}]
  %s2 = inlined_call_operand.vmem [shape: f32[1,128], index: 2, kind: input, shape index: {}]
  %s3 = inlined_call_operand.hbm [shape: f32[2,72,128], index: 3, kind: output, shape index: {}]
  %s4 = sld [smem:[#allocation0]]
  $region45: #{tpu_custom_call.1} parent=0
    _
  %s6 = ssub.s32 1, %s4
  %s7 = scalar_select 0, %s6, %s4
  $region1: #{tpu_custom_call.1} parent=0
    #allocation2 [shape = 'u8[73728]{0}', space=vmem, size = 0x12000, scoped, tag = 'output window, operand 0']
    #allocation3 [shape = 's32[2]{0}', space=sflag, size = 0x8, scoped, tag = 'scoped memory for tpu_custom_call.1']
    %8 = vsyncpa [#allocation3], 0
    %s9 = scalar_lea.sflag [#allocation3], 1
    %10 = vsyncpa %s9, 0
    loop: start=0, step=1, limit=4
    $region2: #{tpu_custom_call.1} parent=1 // loop_pre_header
      _
    $region3: #{tpu_custom_call.1} parent=1 // loop_header
      %s12 = sphi 0, %s16
      %p13 = scmp.ge.s32.totalorder %s12, 4
      %s19 = sphi 0, %s31
      %s20 = sphi 0, %s27
      %s21 = sphi 0, %s19
      %s22 = sphi 0, %s20
      %s23 = sphi 0, %s21
      %s24 = sphi 0, %s22
      %s34 = sphi 0, %s36
      %s37 = sphi 0, %s34
      %s38 = sphi 0, %s37
      %s54 = sphi 0, %s38
      %s60 = sphi 0, %s62
      %s63 = sphi 0, %s60
      %s64 = sphi 0, %s63
      %s80 = sphi 0, %s64
      %s86 = sphi 0, %s88
      %s89 = sphi 0, %s86
      %s90 = sphi 0, %s89
      %s106 = sphi 0, %s90
      %s114 = sphi 0, %s116
      %s117 = sphi 0, %s114
      %s118 = sphi 0, %s117
      %s134 = sphi 0, %s118
    $region4: #{tpu_custom_call.1} parent=1 // loop_header_branch
      %15 = sbr.rel (%p13) target = $region8
    $region5: #{tpu_custom_call.1} parent=1 // loop_body
      %s17 = ssub.s32 %s12, 1
      %s18 = ssub.s32 %s12, 2
      %s25 = sadd.s32 1, %s20
      %p26 = scmp.ge.s32.totalorder %s25, 1
      %s27 = scalar_select %p26, 0, %s25
      %s28 = sadd.s32 1, %s19
      %s29 = scalar_select %p26, %s28, %s19
      %p30 = scmp.ge.s32.totalorder %s29, 2
      %s31 = scalar_select %p30, 0, %s29
      %s32 = ssub.s32 %s19, %s31
      %p33 = scmp.eq.s32.totalorder %s32, 0
      %s35 = sadd.s32 %s34, 1
      %s36 = scalar_select %p33, %s34, %s35
      %p39 = pneg %p33
      %p40 = scmp.eq.s32.totalorder %s12, 1
      %p41 = por %p39, %p40
      %p42 = scmp.ne.s32.totalorder %s34, %s37
      %p43 = scmp.eq.s32.totalorder %s12, 0
      %p44 = por %p42, %p43
      %p45 = scmp.ne.s32.totalorder %s34, %s37
      %p46 = scmp.eq.s32.totalorder %s17, 1
      %p47 = por %p45, %p46
      %p48 = scmp.ne.s32.totalorder %s37, %s38
      %p49 = scmp.eq.s32.totalorder %s17, 0
      %p50 = por %p48, %p49
      %p51 = scmp.ne.s32.totalorder %s37, %s38
      %p52 = scmp.eq.s32.totalorder %s18, 1
      %p53 = por %p51, %p52
      %p55 = scmp.ne.s32.totalorder %s38, %s54
      %p56 = scmp.eq.s32.totalorder %s18, 0
      %p57 = por %p55, %p56
      %s58 = ssub.s32 %s20, %s27
      %p59 = scmp.eq.s32.totalorder %s58, 0
      %s61 = sadd.s32 %s60, 1
      %s62 = scalar_select %p59, %s60, %s61
      %p65 = pneg %p59
      %p66 = scmp.eq.s32.totalorder %s12, 1
      %p67 = por %p65, %p66
      %p68 = scmp.ne.s32.totalorder %s60, %s63
      %p69 = scmp.eq.s32.totalorder %s12, 0
      %p70 = por %p68, %p69
      %p71 = scmp.ne.s32.totalorder %s60, %s63
      %p72 = scmp.eq.s32.totalorder %s17, 1
      %p73 = por %p71, %p72
      %p74 = scmp.ne.s32.totalorder %s63, %s64
      %p75 = scmp.eq.s32.totalorder %s17, 0
      %p76 = por %p74, %p75
      %p77 = scmp.ne.s32.totalorder %s63, %s64
      %p78 = scmp.eq.s32.totalorder %s18, 1
      %p79 = por %p77, %p78
      %p81 = scmp.ne.s32.totalorder %s64, %s80
      %p82 = scmp.eq.s32.totalorder %s18, 0
      %p83 = por %p81, %p82
      %s84 = ssub.s32 %s20, %s27
      %p85 = scmp.eq.s32.totalorder %s84, 0
      %s87 = sadd.s32 %s86, 1
      %s88 = scalar_select %p85, %s86, %s87
      %p91 = pneg %p85
      %p92 = scmp.eq.s32.totalorder %s12, 1
      %p93 = por %p91, %p92
      %p94 = scmp.ne.s32.totalorder %s86, %s89
      %p95 = scmp.eq.s32.totalorder %s12, 0
      %p96 = por %p94, %p95
      %p97 = scmp.ne.s32.totalorder %s86, %s89
      %p98 = scmp.eq.s32.totalorder %s17, 1
      %p99 = por %p97, %p98
      %p100 = scmp.ne.s32.totalorder %s89, %s90
      %p101 = scmp.eq.s32.totalorder %s17, 0
      %p102 = por %p100, %p101
      %p103 = scmp.ne.s32.totalorder %s89, %s90
      %p104 = scmp.eq.s32.totalorder %s18, 1
      %p105 = por %p103, %p104
      %p107 = scmp.ne.s32.totalorder %s90, %s106
      %p108 = scmp.eq.s32.totalorder %s18, 0
      %p109 = por %p107, %p108
      %s110 = ssub.s32 %s19, %s31
      %s111 = ssub.s32 %s20, %s27
      %s112 = sor.u32 %s110, %s111
      %p113 = scmp.eq.s32.totalorder %s112, 0
      %s115 = sadd.s32 %s114, 1
      %s116 = scalar_select %p113, %s114, %s115
      %p119 = pneg %p113
      %p120 = scmp.eq.s32.totalorder %s12, 1
      %p121 = por %p119, %p120
      %p122 = scmp.ne.s32.totalorder %s114, %s117
      %p123 = scmp.eq.s32.totalorder %s12, 0
      %p124 = por %p122, %p123
      %p125 = scmp.ne.s32.totalorder %s114, %s117
      %p126 = scmp.eq.s32.totalorder %s17, 1
      %p127 = por %p125, %p126
      %p128 = scmp.ne.s32.totalorder %s117, %s118
      %p129 = scmp.eq.s32.totalorder %s17, 0
      %p130 = por %p128, %p129
      %p131 = scmp.ne.s32.totalorder %s117, %s118
      %p132 = scmp.eq.s32.totalorder %s18, 1
      %p133 = por %p131, %p132
      %p135 = scmp.ne.s32.totalorder %s118, %s134
      %p136 = scmp.eq.s32.totalorder %s18, 0
      %p137 = por %p135, %p136
      %p138 = scmp.le.s32.totalorder 1, %s12
      %p139 = scmp.lt.s32.totalorder %s12, 3
      %p140 = pnand %p138, %p139
      %p141 = pneg %p140
      // Predicated region
      $region9: #{tpu_custom_call.1} parent=5 // pred_check
        _
      $region10: #{tpu_custom_call.1} parent=5 // pred_check_branch
        %143 = sbr.rel (%p140) target = $region12
      $region11: #{tpu_custom_call.1} parent=5 // pred_region
        %s144 = ssub.s32 %s12, 1
        // Predicated region
        $region13: #{tpu_custom_call.1} parent=11 // pred_check
          %p145 = pneg %p76
        $region14: #{tpu_custom_call.1} parent=11 // pred_check_branch
          %147 = sbr.rel (%p145) target = $region16
        $region15: #{tpu_custom_call.1} parent=11 // pred_region
          %p148 = scmp.lt.s32.totalorder %s22, 0
          %s149 = scalar_select %p148, %s22, 0
          %s150 = smul.addr %s149, 8
          %s151 = scalar_lea.vmem %s1, %s150
        $region16: #{tpu_custom_call.1} parent=11 // pred_fallthru
          _
        // Predicated region
        $region17: #{tpu_custom_call.1} parent=11 // pred_check
          %p152 = pneg %p102
        $region18: #{tpu_custom_call.1} parent=11 // pred_check_branch
          %154 = sbr.rel (%p152) target = $region20
        $region19: #{tpu_custom_call.1} parent=11 // pred_region
          %p155 = scmp.lt.s32.totalorder %s22, 0
          %s156 = scalar_select %p155, %s22, 0
          %s157 = scalar_lea.vmem %s2, %s156
        $region20: #{tpu_custom_call.1} parent=11 // pred_fallthru
          _
      $region12: #{tpu_custom_call.1} parent=5 // pred_fallthru
        _
      %p158 = scmp.lt.s32.totalorder %s12, 2
      // Predicated region
      $region21: #{tpu_custom_call.1} parent=5 // pred_check
        %p159 = pneg %p158
      $region22: #{tpu_custom_call.1} parent=5 // pred_check_branch
        %161 = sbr.rel (%p159) target = $region24
      $region23: #{tpu_custom_call.1} parent=5 // pred_region
        // Predicated region
        $region25: #{tpu_custom_call.1} parent=23 // pred_check
          %p162 = pneg %p44
        $region26: #{tpu_custom_call.1} parent=23 // pred_check_branch
          %164 = sbr.rel (%p162) target = $region28
        $region27: #{tpu_custom_call.1} parent=23 // pred_region
          %p165 = scmp.lt.s32.totalorder %s19, 1
          %s166 = scalar_select %p165, %s19, 1
          %s167 = smul.addr %s166, 11
          %s168 = smul.addr %s167, 8
          %s169 = scalar_lea.vmem %s0, %s168
        $region28: #{tpu_custom_call.1} parent=23 // pred_fallthru
          _
      $region24: #{tpu_custom_call.1} parent=5 // pred_fallthru
        _
      %p170 = scmp.le.s32.totalorder 1, %s12
      %p171 = scmp.lt.s32.totalorder %s12, 3
      %p172 = pnand %p170, %p171
      %p173 = pneg %p172
      // Predicated region
      $region29: #{tpu_custom_call.1} parent=5 // pred_check
        _
      $region30: #{tpu_custom_call.1} parent=5 // pred_check_branch
        %175 = sbr.rel (%p172) target = $region32
      $region31: #{tpu_custom_call.1} parent=5 // pred_region
        %s176 = ssub.s32 %s12, 1
        %p177 = scmp.lt.s32.totalorder %s21, 1
        %s178 = scalar_select %p177, %s21, 1
        %s179 = smul.addr %s178, 11
        %s180 = smul.addr %s179, 8
        %s181 = scalar_lea.vmem %s0, %s180
        %p182 = pneg %p50
        %p183 = pneg %p47
        %p184 = scmp.lt.s32.totalorder %s22, 0
        %s185 = scalar_select %p184, %s22, 0
        %s186 = smul.addr %s185, 8
        %s187 = scalar_lea.vmem %s1, %s186
        %p188 = pneg %p76
        %p189 = pneg %p73
        %p190 = scmp.lt.s32.totalorder %s22, 0
        %s191 = scalar_select %p190, %s22, 0
        %s192 = scalar_lea.vmem %s2, %s191
        %p193 = pneg %p102
        %p194 = pneg %p99
        %p195 = pneg %p130
        %p196 = pneg %p127
        %s197 = sand.u32 %s117, 1
        %s198 = scalar_lea.sflag [#allocation3], %s197
        %s199 = sand.u32 %s117, 1
        %s200 = smul.addr %s199, 72
        %s201 = scalar_lea.vmem [#allocation2], %s200
        %p202 = scmp.lt.s32.totalorder %s21, 1
        %s203 = scalar_select %p202, %s21, 1
        %s204 = smul.addr %s203, 11
        %s205 = smul.addr %s204, 8
        %s206 = scalar_lea.vmem %s0, %s205
        %p207 = scmp.lt.s32.totalorder %s22, 0
        %s208 = scalar_select %p207, %s22, 0
        %s209 = smul.addr %s208, 8
        %s210 = scalar_lea.vmem %s1, %s209
        %p211 = scmp.lt.s32.totalorder %s22, 0
        %s212 = scalar_select %p211, %s22, 0
        %s213 = scalar_lea.vmem %s2, %s212
        %v214 = vld [vmem:[%s206] sm:$0xff]
        %v215 = vld [vmem:[%s206 + $0x8] sm:$0xff]
        %v216 = vld [vmem:[%s206 + $0x10] sm:$0xff]
        %v217 = vld [vmem:[%s206 + $0x18] sm:$0xff]
        %v218 = vld [vmem:[%s206 + $0x20] sm:$0xff]
        %v219 = vld [vmem:[%s206 + $0x28] sm:$0xff]
        %v220 = vld [vmem:[%s206 + $0x30] sm:$0xff]
        %v221 = vld [vmem:[%s206 + $0x38] sm:$0xff]
        %v222 = vld [vmem:[%s206 + $0x40] sm:$0xff]
        %v223 = vld [vmem:[%s210] sm:$0xff]
        %v224 = vld [vmem:[%s210 + $0x8] sm:$0xff]
        %v225 = vld [vmem:[%s206 + $0x1] sm:$0xff]
        %v226 = vld [vmem:[%s206 + $0x9] sm:$0xff]
        %v227 = vld [vmem:[%s206 + $0x11] sm:$0xff]
        %v228 = vld [vmem:[%s206 + $0x19] sm:$0xff]
        %v229 = vld [vmem:[%s206 + $0x21] sm:$0xff]
        %v230 = vld [vmem:[%s206 + $0x29] sm:$0xff]
        %v231 = vld [vmem:[%s206 + $0x31] sm:$0xff]
        %v232 = vld [vmem:[%s206 + $0x39] sm:$0xff]
        %v233 = vld [vmem:[%s206 + $0x41] sm:$0xff]
        %s234 = scalar_lea.vmem %s210, 16
        %v235 = vld [vmem:[%s234] sm:$0xff]
        %v236 = vld [vmem:[%s234 + $0x8] sm:$0xff]
        %vm237 = vcmask 130048
        %v239 = vsel %vm237, %v225, 0
        %v242 = vsel %vm237, %v226, 0
        %v245 = vsel %vm237, %v227, 0
        %v248 = vsel %vm237, %v228, 0
        %v251 = vsel %vm237, %v229, 0
        %v254 = vsel %vm237, %v230, 0
        %v257 = vsel %vm237, %v231, 0
        %v260 = vsel %vm237, %v232, 0
        %v263 = vsel %vm237, %v233, 0
        %265 = vmatpush.msra.mxu0 0.0
        %266 = vmatpush.msra.mxu0 0.0
        %267 = vmatpush.msra.mxu0 0.0
        %268 = vmatpush.msra.mxu0 0.0
        %269 = vmatpush.msra.mxu0 0.0
        %270 = vmatpush.msra.mxu0 0.0
        %271 = vmatpush.msra.mxu0 0.0
        %272 = vmatpush.msra.mxu0 0.0
        %273 = vmatpush.msra.mxu0 0.0
        %274 = vmatpush.msra.mxu0 0.0
        %275 = vmatpush.msra.mxu0 0.0
        %276 = vmatpush.msra.mxu0 0.0
        %277 = vmatpush.msra.mxu0 0.0
        %278 = vmatpush.msra.mxu0 0.0
        %279 = vmatpush.msra.mxu0 %v236
        %280 = vmatpush.msra.mxu0 %v235
        %281 = vmatmul.f32.gmra.mxu0 %v239
        %v282 = vpop.f32.mrf.mxu0
        %v283 = vadd.f32 0.0, %v282
        %284 = vmatmul.f32.gmra.mxu0 %v242
        %v285 = vpop.f32.mrf.mxu0
        %v286 = vadd.f32 0.0, %v285
        %287 = vmatmul.f32.gmra.mxu0 %v245
        %v288 = vpop.f32.mrf.mxu0
        %v289 = vadd.f32 0.0, %v288
        %290 = vmatmul.f32.gmra.mxu0 %v248
        %v291 = vpop.f32.mrf.mxu0
        %v292 = vadd.f32 0.0, %v291
        %293 = vmatmul.f32.gmra.mxu0 %v251
        %v294 = vpop.f32.mrf.mxu0
        %v295 = vadd.f32 0.0, %v294
        %296 = vmatmul.f32.gmra.mxu0 %v254
        %v297 = vpop.f32.mrf.mxu0
        %v298 = vadd.f32 0.0, %v297
        %299 = vmatmul.f32.gmra.mxu0 %v257
        %v300 = vpop.f32.mrf.mxu0
        %v301 = vadd.f32 0.0, %v300
        %302 = vmatmul.f32.gmra.mxu0 %v260
        %v303 = vpop.f32.mrf.mxu0
        %v304 = vadd.f32 0.0, %v303
        %305 = vmatmul.f32.gmra.mxu0 %v263
        %v306 = vpop.f32.mrf.mxu0
        %v307 = vadd.f32 0.0, %v306
        %308 = vdwg.mxu0
        %v310 = vsel %vm237, %v214, 0
        %v313 = vsel %vm237, %v215, 0
        %v316 = vsel %vm237, %v216, 0
        %v319 = vsel %vm237, %v217, 0
        %v322 = vsel %vm237, %v218, 0
        %v325 = vsel %vm237, %v219, 0
        %v328 = vsel %vm237, %v220, 0
        %v331 = vsel %vm237, %v221, 0
        %v334 = vsel %vm237, %v222, 0
        %336 = vmatpush.msra.mxu0 0.0
        %337 = vmatpush.msra.mxu0 0.0
        %338 = vmatpush.msra.mxu0 0.0
        %339 = vmatpush.msra.mxu0 0.0
        %340 = vmatpush.msra.mxu0 0.0
        %341 = vmatpush.msra.mxu0 0.0
        %342 = vmatpush.msra.mxu0 0.0
        %343 = vmatpush.msra.mxu0 0.0
        %344 = vmatpush.msra.mxu0 0.0
        %345 = vmatpush.msra.mxu0 0.0
        %346 = vmatpush.msra.mxu0 0.0
        %347 = vmatpush.msra.mxu0 0.0
        %348 = vmatpush.msra.mxu0 0.0
        %349 = vmatpush.msra.mxu0 0.0
        %350 = vmatpush.msra.mxu0 %v224
        %351 = vmatpush.msra.mxu0 %v223
        %352 = vmatmul.f32.gmra.mxu0 %v310
        %v353 = vpop.f32.mrf.mxu0
        %v354 = vadd.f32 %v283, %v353
        %355 = vmatmul.f32.gmra.mxu0 %v313
        %v356 = vpop.f32.mrf.mxu0
        %v357 = vadd.f32 %v286, %v356
        %358 = vmatmul.f32.gmra.mxu0 %v316
        %v359 = vpop.f32.mrf.mxu0
        %v360 = vadd.f32 %v289, %v359
        %361 = vmatmul.f32.gmra.mxu0 %v319
        %v362 = vpop.f32.mrf.mxu0
        %v363 = vadd.f32 %v292, %v362
        %364 = vmatmul.f32.gmra.mxu0 %v322
        %v365 = vpop.f32.mrf.mxu0
        %v366 = vadd.f32 %v295, %v365
        %367 = vmatmul.f32.gmra.mxu0 %v325
        %v368 = vpop.f32.mrf.mxu0
        %v369 = vadd.f32 %v298, %v368
        %370 = vmatmul.f32.gmra.mxu0 %v328
        %v371 = vpop.f32.mrf.mxu0
        %v372 = vadd.f32 %v301, %v371
        %373 = vmatmul.f32.gmra.mxu0 %v331
        %v374 = vpop.f32.mrf.mxu0
        %v375 = vadd.f32 %v304, %v374
        %376 = vmatmul.f32.gmra.mxu0 %v334
        %v377 = vpop.f32.mrf.mxu0
        %v378 = vadd.f32 %v307, %v377
        %379 = vdwg.mxu0
        %v380 = vld [vmem:[%s206 + $0x9] sm:$0xff]
        %v381 = vld [vmem:[%s206 + $0x11] sm:$0xff]
        %v382 = vld [vmem:[%s206 + $0x19] sm:$0xff]
        %v383 = vld [vmem:[%s206 + $0x21] sm:$0xff]
        %v384 = vld [vmem:[%s206 + $0x29] sm:$0xff]
        %v385 = vld [vmem:[%s206 + $0x31] sm:$0xff]
        %v386 = vld [vmem:[%s206 + $0x39] sm:$0xff]
        %v387 = vld [vmem:[%s206 + $0x41] sm:$0xff]
        %v388 = vld [vmem:[%s206 + $0x49] sm:$0xff]
        %s389 = scalar_lea.vmem %s210, 32
        %v390 = vld [vmem:[%s389] sm:$0xff]
        %v391 = vld [vmem:[%s389 + $0x8] sm:$0xff]
        %v393 = vsel %vm237, %v380, 0
        %v396 = vsel %vm237, %v381, 0
        %v399 = vsel %vm237, %v382, 0
        %v402 = vsel %vm237, %v383, 0
        %v405 = vsel %vm237, %v384, 0
        %v408 = vsel %vm237, %v385, 0
        %v411 = vsel %vm237, %v386, 0
        %v414 = vsel %vm237, %v387, 0
        %v417 = vsel %vm237, %v388, 0
        %419 = vmatpush.msra.mxu0 0.0
        %420 = vmatpush.msra.mxu0 0.0
        %421 = vmatpush.msra.mxu0 0.0
        %422 = vmatpush.msra.mxu0 0.0
        %423 = vmatpush.msra.mxu0 0.0
        %424 = vmatpush.msra.mxu0 0.0
        %425 = vmatpush.msra.mxu0 0.0
        %426 = vmatpush.msra.mxu0 0.0
        %427 = vmatpush.msra.mxu0 0.0
        %428 = vmatpush.msra.mxu0 0.0
        %429 = vmatpush.msra.mxu0 0.0
        %430 = vmatpush.msra.mxu0 0.0
        %431 = vmatpush.msra.mxu0 0.0
        %432 = vmatpush.msra.mxu0 0.0
        %433 = vmatpush.msra.mxu0 %v391
        %434 = vmatpush.msra.mxu0 %v390
        %435 = vmatmul.f32.gmra.mxu0 %v393
        %v436 = vpop.f32.mrf.mxu0
        %v437 = vadd.f32 0.0, %v436
        %438 = vmatmul.f32.gmra.mxu0 %v396
        %v439 = vpop.f32.mrf.mxu0
        %v440 = vadd.f32 0.0, %v439
        %441 = vmatmul.f32.gmra.mxu0 %v399
        %v442 = vpop.f32.mrf.mxu0
        %v443 = vadd.f32 0.0, %v442
        %444 = vmatmul.f32.gmra.mxu0 %v402
        %v445 = vpop.f32.mrf.mxu0
        %v446 = vadd.f32 0.0, %v445
        %447 = vmatmul.f32.gmra.mxu0 %v405
        %v448 = vpop.f32.mrf.mxu0
        %v449 = vadd.f32 0.0, %v448
        %450 = vmatmul.f32.gmra.mxu0 %v408
        %v451 = vpop.f32.mrf.mxu0
        %v452 = vadd.f32 0.0, %v451
        %453 = vmatmul.f32.gmra.mxu0 %v411
        %v454 = vpop.f32.mrf.mxu0
        %v455 = vadd.f32 0.0, %v454
        %456 = vmatmul.f32.gmra.mxu0 %v414
        %v457 = vpop.f32.mrf.mxu0
        %v458 = vadd.f32 0.0, %v457
        %459 = vmatmul.f32.gmra.mxu0 %v417
        %v460 = vpop.f32.mrf.mxu0
        %v461 = vadd.f32 0.0, %v460
        %462 = vdwg.mxu0
        %v463 = vadd.f32 %v354, %v437
        %v464 = vadd.f32 %v357, %v440
        %v465 = vadd.f32 %v360, %v443
        %v466 = vadd.f32 %v363, %v446
        %v467 = vadd.f32 %v366, %v449
        %v468 = vadd.f32 %v369, %v452
        %v469 = vadd.f32 %v372, %v455
        %v470 = vadd.f32 %v375, %v458
        %v471 = vadd.f32 %v378, %v461
        %v472 = vld [vmem:[%s206 + $0xa] sm:$0xff]
        %v473 = vld [vmem:[%s206 + $0x12] sm:$0xff]
        %v474 = vld [vmem:[%s206 + $0x1a] sm:$0xff]
        %v475 = vld [vmem:[%s206 + $0x22] sm:$0xff]
        %v476 = vld [vmem:[%s206 + $0x2a] sm:$0xff]
        %v477 = vld [vmem:[%s206 + $0x32] sm:$0xff]
        %v478 = vld [vmem:[%s206 + $0x3a] sm:$0xff]
        %v479 = vld [vmem:[%s206 + $0x42] sm:$0xff]
        %v480 = vld [vmem:[%s206 + $0x4a] sm:$0xff]
        %s481 = scalar_lea.vmem %s210, 48
        %v482 = vld [vmem:[%s481] sm:$0xff]
        %v483 = vld [vmem:[%s481 + $0x8] sm:$0xff]
        %v485 = vsel %vm237, %v472, 0
        %v488 = vsel %vm237, %v473, 0
        %v491 = vsel %vm237, %v474, 0
        %v494 = vsel %vm237, %v475, 0
        %v497 = vsel %vm237, %v476, 0
        %v500 = vsel %vm237, %v477, 0
        %v503 = vsel %vm237, %v478, 0
        %v506 = vsel %vm237, %v479, 0
        %v509 = vsel %vm237, %v480, 0
        %511 = vmatpush.msra.mxu0 0.0
        %512 = vmatpush.msra.mxu0 0.0
        %513 = vmatpush.msra.mxu0 0.0
        %514 = vmatpush.msra.mxu0 0.0
        %515 = vmatpush.msra.mxu0 0.0
        %516 = vmatpush.msra.mxu0 0.0
        %517 = vmatpush.msra.mxu0 0.0
        %518 = vmatpush.msra.mxu0 0.0
        %519 = vmatpush.msra.mxu0 0.0
        %520 = vmatpush.msra.mxu0 0.0
        %521 = vmatpush.msra.mxu0 0.0
        %522 = vmatpush.msra.mxu0 0.0
        %523 = vmatpush.msra.mxu0 0.0
        %524 = vmatpush.msra.mxu0 0.0
        %525 = vmatpush.msra.mxu0 %v483
        %526 = vmatpush.msra.mxu0 %v482
        %527 = vmatmul.f32.gmra.mxu0 %v485
        %v528 = vpop.f32.mrf.mxu0
        %v529 = vadd.f32 0.0, %v528
        %530 = vmatmul.f32.gmra.mxu0 %v488
        %v531 = vpop.f32.mrf.mxu0
        %v532 = vadd.f32 0.0, %v531
        %533 = vmatmul.f32.gmra.mxu0 %v491
        %v534 = vpop.f32.mrf.mxu0
        %v535 = vadd.f32 0.0, %v534
        %536 = vmatmul.f32.gmra.mxu0 %v494
        %v537 = vpop.f32.mrf.mxu0
        %v538 = vadd.f32 0.0, %v537
        %539 = vmatmul.f32.gmra.mxu0 %v497
        %v540 = vpop.f32.mrf.mxu0
        %v541 = vadd.f32 0.0, %v540
        %542 = vmatmul.f32.gmra.mxu0 %v500
        %v543 = vpop.f32.mrf.mxu0
        %v544 = vadd.f32 0.0, %v543
        %545 = vmatmul.f32.gmra.mxu0 %v503
        %v546 = vpop.f32.mrf.mxu0
        %v547 = vadd.f32 0.0, %v546
        %548 = vmatmul.f32.gmra.mxu0 %v506
        %v549 = vpop.f32.mrf.mxu0
        %v550 = vadd.f32 0.0, %v549
        %551 = vmatmul.f32.gmra.mxu0 %v509
        %v552 = vpop.f32.mrf.mxu0
        %v553 = vadd.f32 0.0, %v552
        %554 = vdwg.mxu0
        %v555 = vadd.f32 %v463, %v529
        %v556 = vadd.f32 %v464, %v532
        %v557 = vadd.f32 %v465, %v535
        %v558 = vadd.f32 %v466, %v538
        %v559 = vadd.f32 %v467, %v541
        %v560 = vadd.f32 %v468, %v544
        %v561 = vadd.f32 %v469, %v547
        %v562 = vadd.f32 %v470, %v550
        %v563 = vadd.f32 %v471, %v553
        %v564 = vlaneseq
        %v565 = vshrl.u32 %v564, 7
        %v566 = vadd.s32 %v565, 8
        %v567 = vadd.s32 %v565, 16
        %v568 = vadd.s32 %v565, 24
        %v569 = vadd.s32 %v565, 32
        %v570 = vadd.s32 %v565, 40
        %v571 = vadd.s32 %v565, 48
        %v572 = vadd.s32 %v565, 56
        %v573 = vadd.s32 %v565, 64
        %vm574 = vcmp.lt.s32.totalorder %v565, 0
        %v575 = vsub.s32 0, %v565
        %v576 = vsel %vm574, %v575, %v565
        %v577 = vand.u32 %v576, 65535
        %v578 = vshrl.u32 %v576, 16
        %v580 = vmul.u32 %v577, 14564
        %v581 = vmul.u32 %v577, 58254
        %v582 = vmul.u32 %v578, 14564
        %v583 = vmul.u32 %v578, 58254
        %v584 = vshll.u32 %v581, 16
        %v585 = vshrl.u32 %v581, 16
        %v586 = vshll.u32 %v582, 16
        %v587 = vshrl.u32 %v582, 16
        %vm588 = vc.u32 %v580, %v584
        %v589 = vsel %vm588, 1, 0
        %v590 = vadd.s32 %v580, %v584
        %v591 = vadd.s32 %v583, %v589
        %vm592 = vc.u32 %v590, %v586
        %v593 = vsel %vm592, 1, 0
        %v594 = vadd.s32 %v590, %v586
        %v595 = vadd.s32 %v591, %v593
        %v596 = vadd.s32 %v595, %v585
        %v597 = vadd.s32 %v596, %v587
        %v598 = vshrl.u32 %v597, 3
        %v599 = vmul.u32 %v598, 9
        %v600 = vsub.s32 %v576, %v599
        %v601 = vsub.s32 0, %v600
        %v602 = vsel %vm574, %v601, %v600
        %vm603 = vcmp.lt.s32.totalorder %v566, 0
        %v604 = vsub.s32 0, %v566
        %v605 = vsel %vm603, %v604, %v566
        %v606 = vand.u32 %v605, 65535
        %v607 = vshrl.u32 %v605, 16
        %v609 = vmul.u32 %v606, 14564
        %v610 = vmul.u32 %v606, 58254
        %v611 = vmul.u32 %v607, 14564
        %v612 = vmul.u32 %v607, 58254
        %v613 = vshll.u32 %v610, 16
        %v614 = vshrl.u32 %v610, 16
        %v615 = vshll.u32 %v611, 16
        %v616 = vshrl.u32 %v611, 16
        %vm617 = vc.u32 %v609, %v613
        %v618 = vsel %vm617, 1, 0
        %v619 = vadd.s32 %v609, %v613
        %v620 = vadd.s32 %v612, %v618
        %vm621 = vc.u32 %v619, %v615
        %v622 = vsel %vm621, 1, 0
        %v623 = vadd.s32 %v619, %v615
        %v624 = vadd.s32 %v620, %v622
        %v625 = vadd.s32 %v624, %v614
        %v626 = vadd.s32 %v625, %v616
        %v627 = vshrl.u32 %v626, 3
        %v628 = vmul.u32 %v627, 9
        %v629 = vsub.s32 %v605, %v628
        %v630 = vsub.s32 0, %v629
        %v631 = vsel %vm603, %v630, %v629
        %vm632 = vcmp.lt.s32.totalorder %v567, 0
        %v633 = vsub.s32 0, %v567
        %v634 = vsel %vm632, %v633, %v567
        %v635 = vand.u32 %v634, 65535
        %v636 = vshrl.u32 %v634, 16
        %v638 = vmul.u32 %v635, 14564
        %v639 = vmul.u32 %v635, 58254
        %v640 = vmul.u32 %v636, 14564
        %v641 = vmul.u32 %v636, 58254
        %v642 = vshll.u32 %v639, 16
        %v643 = vshrl.u32 %v639, 16
        %v644 = vshll.u32 %v640, 16
        %v645 = vshrl.u32 %v640, 16
        %vm646 = vc.u32 %v638, %v642
        %v647 = vsel %vm646, 1, 0
        %v648 = vadd.s32 %v638, %v642
        %v649 = vadd.s32 %v641, %v647
        %vm650 = vc.u32 %v648, %v644
        %v651 = vsel %vm650, 1, 0
        %v652 = vadd.s32 %v648, %v644
        %v653 = vadd.s32 %v649, %v651
        %v654 = vadd.s32 %v653, %v643
        %v655 = vadd.s32 %v654, %v645
        %v656 = vshrl.u32 %v655, 3
        %v657 = vmul.u32 %v656, 9
        %v658 = vsub.s32 %v634, %v657
        %v659 = vsub.s32 0, %v658
        %v660 = vsel %vm632, %v659, %v658
        %vm661 = vcmp.lt.s32.totalorder %v568, 0
        %v662 = vsub.s32 0, %v568
        %v663 = vsel %vm661, %v662, %v568
        %v664 = vand.u32 %v663, 65535
        %v665 = vshrl.u32 %v663, 16
        %v667 = vmul.u32 %v664, 14564
        %v668 = vmul.u32 %v664, 58254
        %v669 = vmul.u32 %v665, 14564
        %v670 = vmul.u32 %v665, 58254
        %v671 = vshll.u32 %v668, 16
        %v672 = vshrl.u32 %v668, 16
        %v673 = vshll.u32 %v669, 16
        %v674 = vshrl.u32 %v669, 16
        %vm675 = vc.u32 %v667, %v671
        %v676 = vsel %vm675, 1, 0
        %v677 = vadd.s32 %v667, %v671
        %v678 = vadd.s32 %v670, %v676
        %vm679 = vc.u32 %v677, %v673
        %v680 = vsel %vm679, 1, 0
        %v681 = vadd.s32 %v677, %v673
        %v682 = vadd.s32 %v678, %v680
        %v683 = vadd.s32 %v682, %v672
        %v684 = vadd.s32 %v683, %v674
        %v685 = vshrl.u32 %v684, 3
        %v686 = vmul.u32 %v685, 9
        %v687 = vsub.s32 %v663, %v686
        %v688 = vsub.s32 0, %v687
        %v689 = vsel %vm661, %v688, %v687
        %vm690 = vcmp.lt.s32.totalorder %v569, 0
        %v691 = vsub.s32 0, %v569
        %v692 = vsel %vm690, %v691, %v569
        %v693 = vand.u32 %v692, 65535
        %v694 = vshrl.u32 %v692, 16
        %v696 = vmul.u32 %v693, 14564
        %v697 = vmul.u32 %v693, 58254
        %v698 = vmul.u32 %v694, 14564
        %v699 = vmul.u32 %v694, 58254
        %v700 = vshll.u32 %v697, 16
        %v701 = vshrl.u32 %v697, 16
        %v702 = vshll.u32 %v698, 16
        %v703 = vshrl.u32 %v698, 16
        %vm704 = vc.u32 %v696, %v700
        %v705 = vsel %vm704, 1, 0
        %v706 = vadd.s32 %v696, %v700
        %v707 = vadd.s32 %v699, %v705
        %vm708 = vc.u32 %v706, %v702
        %v709 = vsel %vm708, 1, 0
        %v710 = vadd.s32 %v706, %v702
        %v711 = vadd.s32 %v707, %v709
        %v712 = vadd.s32 %v711, %v701
        %v713 = vadd.s32 %v712, %v703
        %v714 = vshrl.u32 %v713, 3
        %v715 = vmul.u32 %v714, 9
        %v716 = vsub.s32 %v692, %v715
        %v717 = vsub.s32 0, %v716
        %v718 = vsel %vm690, %v717, %v716
        %vm719 = vcmp.lt.s32.totalorder %v570, 0
        %v720 = vsub.s32 0, %v570
        %v721 = vsel %vm719, %v720, %v570
        %v722 = vand.u32 %v721, 65535
        %v723 = vshrl.u32 %v721, 16
        %v725 = vmul.u32 %v722, 14564
        %v726 = vmul.u32 %v722, 58254
        %v727 = vmul.u32 %v723, 14564
        %v728 = vmul.u32 %v723, 58254
        %v729 = vshll.u32 %v726, 16
        %v730 = vshrl.u32 %v726, 16
        %v731 = vshll.u32 %v727, 16
        %v732 = vshrl.u32 %v727, 16
        %vm733 = vc.u32 %v725, %v729
        %v734 = vsel %vm733, 1, 0
        %v735 = vadd.s32 %v725, %v729
        %v736 = vadd.s32 %v728, %v734
        %vm737 = vc.u32 %v735, %v731
        %v738 = vsel %vm737, 1, 0
        %v739 = vadd.s32 %v735, %v731
        %v740 = vadd.s32 %v736, %v738
        %v741 = vadd.s32 %v740, %v730
        %v742 = vadd.s32 %v741, %v732
        %v743 = vshrl.u32 %v742, 3
        %v744 = vmul.u32 %v743, 9
        %v745 = vsub.s32 %v721, %v744
        %v746 = vsub.s32 0, %v745
        %v747 = vsel %vm719, %v746, %v745
        %vm748 = vcmp.lt.s32.totalorder %v571, 0
        %v749 = vsub.s32 0, %v571
        %v750 = vsel %vm748, %v749, %v571
        %v751 = vand.u32 %v750, 65535
        %v752 = vshrl.u32 %v750, 16
        %v754 = vmul.u32 %v751, 14564
        %v755 = vmul.u32 %v751, 58254
        %v756 = vmul.u32 %v752, 14564
        %v757 = vmul.u32 %v752, 58254
        %v758 = vshll.u32 %v755, 16
        %v759 = vshrl.u32 %v755, 16
        %v760 = vshll.u32 %v756, 16
        %v761 = vshrl.u32 %v756, 16
        %vm762 = vc.u32 %v754, %v758
        %v763 = vsel %vm762, 1, 0
        %v764 = vadd.s32 %v754, %v758
        %v765 = vadd.s32 %v757, %v763
        %vm766 = vc.u32 %v764, %v760
        %v767 = vsel %vm766, 1, 0
        %v768 = vadd.s32 %v764, %v760
        %v769 = vadd.s32 %v765, %v767
        %v770 = vadd.s32 %v769, %v759
        %v771 = vadd.s32 %v770, %v761
        %v772 = vshrl.u32 %v771, 3
        %v773 = vmul.u32 %v772, 9
        %v774 = vsub.s32 %v750, %v773
        %v775 = vsub.s32 0, %v774
        %v776 = vsel %vm748, %v775, %v774
        %vm777 = vcmp.lt.s32.totalorder %v572, 0
        %v778 = vsub.s32 0, %v572
        %v779 = vsel %vm777, %v778, %v572
        %v780 = vand.u32 %v779, 65535
        %v781 = vshrl.u32 %v779, 16
        %v783 = vmul.u32 %v780, 14564
        %v784 = vmul.u32 %v780, 58254
        %v785 = vmul.u32 %v781, 14564
        %v786 = vmul.u32 %v781, 58254
        %v787 = vshll.u32 %v784, 16
        %v788 = vshrl.u32 %v784, 16
        %v789 = vshll.u32 %v785, 16
        %v790 = vshrl.u32 %v785, 16
        %vm791 = vc.u32 %v783, %v787
        %v792 = vsel %vm791, 1, 0
        %v793 = vadd.s32 %v783, %v787
        %v794 = vadd.s32 %v786, %v792
        %vm795 = vc.u32 %v793, %v789
        %v796 = vsel %vm795, 1, 0
        %v797 = vadd.s32 %v793, %v789
        %v798 = vadd.s32 %v794, %v796
        %v799 = vadd.s32 %v798, %v788
        %v800 = vadd.s32 %v799, %v790
        %v801 = vshrl.u32 %v800, 3
        %v802 = vmul.u32 %v801, 9
        %v803 = vsub.s32 %v779, %v802
        %v804 = vsub.s32 0, %v803
        %v805 = vsel %vm777, %v804, %v803
        %vm806 = vcmp.lt.s32.totalorder %v573, 0
        %v807 = vsub.s32 0, %v573
        %v808 = vsel %vm806, %v807, %v573
        %v809 = vand.u32 %v808, 65535
        %v810 = vshrl.u32 %v808, 16
        %v812 = vmul.u32 %v809, 14564
        %v813 = vmul.u32 %v809, 58254
        %v814 = vmul.u32 %v810, 14564
        %v815 = vmul.u32 %v810, 58254
        %v816 = vshll.u32 %v813, 16
        %v817 = vshrl.u32 %v813, 16
        %v818 = vshll.u32 %v814, 16
        %v819 = vshrl.u32 %v814, 16
        %vm820 = vc.u32 %v812, %v816
        %v821 = vsel %vm820, 1, 0
        %v822 = vadd.s32 %v812, %v816
        %v823 = vadd.s32 %v815, %v821
        %vm824 = vc.u32 %v822, %v818
        %v825 = vsel %vm824, 1, 0
        %v826 = vadd.s32 %v822, %v818
        %v827 = vadd.s32 %v823, %v825
        %v828 = vadd.s32 %v827, %v817
        %v829 = vadd.s32 %v828, %v819
        %v830 = vshrl.u32 %v829, 3
        %v831 = vmul.u32 %v830, 9
        %v832 = vsub.s32 %v808, %v831
        %v833 = vsub.s32 0, %v832
        %v834 = vsel %vm806, %v833, %v832
        %vm835 = vcmp.ne.s32.totalorder %v602, 0
        %vm836 = vcmp.ne.s32.totalorder %v631, 0
        %vm837 = vcmp.ne.s32.totalorder %v660, 0
        %vm838 = vcmp.ne.s32.totalorder %v689, 0
        %vm839 = vcmp.ne.s32.totalorder %v718, 0
        %vm840 = vcmp.ne.s32.totalorder %v747, 0
        %vm841 = vcmp.ne.s32.totalorder %v776, 0
        %vm842 = vcmp.ne.s32.totalorder %v805, 0
        %vm843 = vcmp.ne.s32.totalorder %v834, 0
        %vm844 = vcmp.lt.s32.totalorder %v602, 0
        %vm845 = vcmp.lt.s32.totalorder %v631, 0
        %vm846 = vcmp.lt.s32.totalorder %v660, 0
        %vm847 = vcmp.lt.s32.totalorder %v689, 0
        %vm848 = vcmp.lt.s32.totalorder %v718, 0
        %vm849 = vcmp.lt.s32.totalorder %v747, 0
        %vm850 = vcmp.lt.s32.totalorder %v776, 0
        %vm851 = vcmp.lt.s32.totalorder %v805, 0
        %vm852 = vcmp.lt.s32.totalorder %v834, 0
        %vm853 = vmand %vm844, %vm835
        %vm854 = vmand %vm845, %vm836
        %vm855 = vmand %vm846, %vm837
        %vm856 = vmand %vm847, %vm838
        %vm857 = vmand %vm848, %vm839
        %vm858 = vmand %vm849, %vm840
        %vm859 = vmand %vm850, %vm841
        %vm860 = vmand %vm851, %vm842
        %vm861 = vmand %vm852, %vm843
        %v862 = vadd.s32 %v602, 9
        %v863 = vadd.s32 %v631, 9
        %v864 = vadd.s32 %v660, 9
        %v865 = vadd.s32 %v689, 9
        %v866 = vadd.s32 %v718, 9
        %v867 = vadd.s32 %v747, 9
        %v868 = vadd.s32 %v776, 9
        %v869 = vadd.s32 %v805, 9
        %v870 = vadd.s32 %v834, 9
        %v871 = vsel %vm853, %v862, %v602
        %v872 = vsel %vm854, %v863, %v631
        %v873 = vsel %vm855, %v864, %v660
        %v874 = vsel %vm856, %v865, %v689
        %v875 = vsel %vm857, %v866, %v718
        %v876 = vsel %vm858, %v867, %v747
        %v877 = vsel %vm859, %v868, %v776
        %v878 = vsel %vm860, %v869, %v805
        %v879 = vsel %vm861, %v870, %v834
        %vm880 = vcmp.lt.s32.totalorder %v871, 8
        %vm881 = vcmp.lt.s32.totalorder %v872, 8
        %vm882 = vcmp.lt.s32.totalorder %v873, 8
        %vm883 = vcmp.lt.s32.totalorder %v874, 8
        %vm884 = vcmp.lt.s32.totalorder %v875, 8
        %vm885 = vcmp.lt.s32.totalorder %v876, 8
        %vm886 = vcmp.lt.s32.totalorder %v877, 8
        %vm887 = vcmp.lt.s32.totalorder %v878, 8
        %vm888 = vcmp.lt.s32.totalorder %v879, 8
        %v889 = vsel %vm880, 1, 0
        %v890 = vsel %vm881, 1, 0
        %v891 = vsel %vm882, 1, 0
        %v892 = vsel %vm883, 1, 0
        %v893 = vsel %vm884, 1, 0
        %v894 = vsel %vm885, 1, 0
        %v895 = vsel %vm886, 1, 0
        %v896 = vsel %vm887, 1, 0
        %v897 = vsel %vm888, 1, 0
        %v898 = vcvt.s32.f32 %v889
        %v899 = vcvt.s32.f32 %v890
        %v900 = vcvt.s32.f32 %v891
        %v901 = vcvt.s32.f32 %v892
        %v902 = vcvt.s32.f32 %v893
        %v903 = vcvt.s32.f32 %v894
        %v904 = vcvt.s32.f32 %v895
        %v905 = vcvt.s32.f32 %v896
        %v906 = vcvt.s32.f32 %v897
        %v907 = vmul.f32 %v555, %v898
        %v908 = vmul.f32 %v556, %v899
        %v909 = vmul.f32 %v557, %v900
        %v910 = vmul.f32 %v558, %v901
        %v911 = vmul.f32 %v559, %v902
        %v912 = vmul.f32 %v560, %v903
        %v913 = vmul.f32 %v561, %v904
        %v914 = vmul.f32 %v562, %v905
        %v915 = vmul.f32 %v563, %v906
        %v916 = vadd.f32 %v907, %v908
        %v917 = vadd.f32 %v916, %v909
        %v918 = vadd.f32 %v917, %v910
        %v919 = vadd.f32 %v918, %v911
        %v920 = vadd.f32 %v919, %v912
        %v921 = vadd.f32 %v920, %v913
        %v922 = vadd.f32 %v921, %v914
        %v923 = vadd.f32 %v922, %v915
        %v924 = vrot.slane %v923, 4
        %v925 = vadd.f32 %v923, %v924
        %v926 = vrot.slane %v925, 2
        %v927 = vadd.f32 %v925, %v926
        %v928 = vrot.slane %v927, 1
        %v929 = vadd.f32 %v927, %v928
        %v930 = vmul.f32 %v929, 0.015625
        %v931 = vmul.f32 %v907, %v555
        %v932 = vmul.f32 %v908, %v556
        %v933 = vmul.f32 %v909, %v557
        %v934 = vmul.f32 %v910, %v558
        %v935 = vmul.f32 %v911, %v559
        %v936 = vmul.f32 %v912, %v560
        %v937 = vmul.f32 %v913, %v561
        %v938 = vmul.f32 %v914, %v562
        %v939 = vmul.f32 %v915, %v563
        %v940 = vadd.f32 %v931, %v932
        %v941 = vadd.f32 %v940, %v933
        %v942 = vadd.f32 %v941, %v934
        %v943 = vadd.f32 %v942, %v935
        %v944 = vadd.f32 %v943, %v936
        %v945 = vadd.f32 %v944, %v937
        %v946 = vadd.f32 %v945, %v938
        %v947 = vadd.f32 %v946, %v939
        %v948 = vrot.slane %v947, 4
        %v949 = vadd.f32 %v947, %v948
        %v950 = vrot.slane %v949, 2
        %v951 = vadd.f32 %v949, %v950
        %v952 = vrot.slane %v951, 1
        %v953 = vadd.f32 %v951, %v952
        %v954 = vmul.f32 %v953, 0.015625
        %v955 = vmul.f32 %v930, %v930
        %v956 = vsub.f32 %v954, %v955
        %v957 = vmax.f32 %v956, 0.0
        %v958 = vsub.f32 %v555, %v930
        %v959 = vsub.f32 %v556, %v930
        %v960 = vsub.f32 %v557, %v930
        %v961 = vsub.f32 %v558, %v930
        %v962 = vsub.f32 %v559, %v930
        %v963 = vsub.f32 %v560, %v930
        %v964 = vsub.f32 %v561, %v930
        %v965 = vsub.f32 %v562, %v930
        %v966 = vsub.f32 %v563, %v930
        %v967 = vadd.f32 %v957, 1e-05
        %v968 = vrsqrt.pop %v967
        %v969 = vmul.f32 %v968, %v967
        %v970 = vmul.f32 %v969, %v968
        %v971 = vmul.f32 0.5, %v970
        %v972 = vsub.f32 1.5, %v971
        %v973 = vmul.f32 %v968, %v972
        %vm974 = vweird.f32 %v967
        %vm975 = vweird.f32 %v968
        %vm976 = vmor %vm974, %vm975
        %v977 = vsel %vm976, %v968, %v973
        %v978 = vmul.f32 %v958, %v977
        %v979 = vmul.f32 %v959, %v977
        %v980 = vmul.f32 %v960, %v977
        %v981 = vmul.f32 %v961, %v977
        %v982 = vmul.f32 %v962, %v977
        %v983 = vmul.f32 %v963, %v977
        %v984 = vmul.f32 %v964, %v977
        %v985 = vmul.f32 %v965, %v977
        %v986 = vmul.f32 %v966, %v977
        %v987 = vmul.f32 %v978, 0.2
        %v988 = vmul.f32 %v979, 0.2
        %v989 = vmul.f32 %v980, 0.2
        %v990 = vmul.f32 %v981, 0.2
        %v991 = vmul.f32 %v982, 0.2
        %v992 = vmul.f32 %v983, 0.2
        %v993 = vmul.f32 %v984, 0.2
        %v994 = vmul.f32 %v985, 0.2
        %v995 = vmul.f32 %v986, 0.2
        %v996 = vmax.f32 %v978, %v987
        %v997 = vmax.f32 %v979, %v988
        %v998 = vmax.f32 %v980, %v989
        %v999 = vmax.f32 %v981, %v990
        %v1000 = vmax.f32 %v982, %v991
        %v1001 = vmax.f32 %v983, %v992
        %v1002 = vmax.f32 %v984, %v993
        %v1003 = vmax.f32 %v985, %v994
        %v1004 = vmax.f32 %v986, %v995
        %1005 = vst [vmem:[%s201] sm:$0xff] %v996
        %1006 = vst [vmem:[%s201 + $0x8] sm:$0xff] %v997
        %1007 = vst [vmem:[%s201 + $0x10] sm:$0xff] %v998
        %1008 = vst [vmem:[%s201 + $0x18] sm:$0xff] %v999
        %1009 = vst [vmem:[%s201 + $0x20] sm:$0xff] %v1000
        %1010 = vst [vmem:[%s201 + $0x28] sm:$0xff] %v1001
        %1011 = vst [vmem:[%s201 + $0x30] sm:$0xff] %v1002
        %1012 = vst [vmem:[%s201 + $0x38] sm:$0xff] %v1003
        %1013 = vst [vmem:[%s201 + $0x40] sm:$0xff] %v1004
        %s1014 = sand.u32 %s117, 1
        %s1015 = scalar_lea.sflag [#allocation3], %s1014
        %s1016 = sand.u32 %s117, 1
        %s1017 = smul.addr %s1016, 72
        %s1018 = scalar_lea.vmem [#allocation2], %s1017
        // Predicated region
        $region33: #{tpu_custom_call.1} parent=31 // pred_check
          %p1019 = pneg %p127
        $region34: #{tpu_custom_call.1} parent=31 // pred_check_branch
          %1021 = sbr.rel (%p1019) target = $region36
        $region35: #{tpu_custom_call.1} parent=31 // pred_region
          %1023 = vsyncadd %s1015, 0
          %s1024 = smul.addr %s21, 9
          %s1025 = sadd.s32 %s22, %s1024
          %s1026 = smul.addr %s1025, 8
          %s1027 = scalar_lea.hbm %s3, %s1026
          %s1028 = sshll.u32 %s1018, 4
          %s1029 = int_to_ptr.vmem [resolvable:$true] %s1028
          %s1030 = sshll.u32 %s1027, 4
          %s1031 = int_to_ptr.hbm [resolvable:$true] %s1030
          %1036 = dma.vmem_to_hbm [thread:$0]  %s1029, 1152, %s1031, %s1015, 128, 128, 8
        $region36: #{tpu_custom_call.1} parent=31 // pred_fallthru
          _
      $region32: #{tpu_custom_call.1} parent=5 // pred_fallthru
        _
      %p1037 = scmp.le.s32.totalorder 2, %s12
      // Predicated region
      $region37: #{tpu_custom_call.1} parent=5 // pred_check
        %p1038 = pneg %p1037
      $region38: #{tpu_custom_call.1} parent=5 // pred_check_branch
        %1040 = sbr.rel (%p1038) target = $region40
      $region39: #{tpu_custom_call.1} parent=5 // pred_region
        %s1041 = ssub.s32 %s12, 2
        // Predicated region
        $region41: #{tpu_custom_call.1} parent=39 // pred_check
          %p1042 = pneg %p133
        $region42: #{tpu_custom_call.1} parent=39 // pred_check_branch
          %1044 = sbr.rel (%p1042) target = $region44
        $region43: #{tpu_custom_call.1} parent=39 // pred_region
          %s1045 = sand.u32 %s118, 1
          %s1046 = scalar_lea.sflag [#allocation3], %s1045
          %s1047 = sand.u32 %s118, 1
          %s1048 = smul.addr %s1047, 72
          %s1049 = scalar_lea.vmem [#allocation2], %s1048
          %1051 = dma.done %s1046, 1152
        $region44: #{tpu_custom_call.1} parent=39 // pred_fallthru
          _
      $region40: #{tpu_custom_call.1} parent=5 // pred_fallthru
        _
    $region6: #{tpu_custom_call.1} parent=1 // loop_footer
      %s16 = sadd.s32 1, %s12
    $region7: #{tpu_custom_call.1} parent=1 // loop_footer_branch
      %11 = sbr.rel target = $region3
    $region8: #{tpu_custom_call.1} parent=1 // loop_exit
      _
    %1052 = vsyncpa [#allocation3], 1
    %s1053 = scalar_lea.sflag [#allocation3], 1
    %1054 = vsyncpa %s1053, 1

</llo_original>
